<compile_context>
chip_gen: v5e
topology: v5e:2x2
jax: 0.10.0
libtpu: 0.0.40
codegen_flags: <defaults>
</compile_context>

<pallas_src>
import functools

import numpy as np
import jax
import jax.numpy as jnp
from jax.experimental import pallas as pl
from jax.experimental.pallas import tpu as pltpu


def _round_up(x, m):
    return (x + m - 1) // m * m


def _cdiv(a, b):
    return (a + b - 1) // b


# ---------------------------------------------------------------------------
# Kernel
# ---------------------------------------------------------------------------
def decoder_kernel(feat_ref, p1_ref,
                   wx_ref, wp_ref, whh_ref, wlr_ref, blr_ref,
                   out_ref, *, d, pad2d, matmul_dtype):
    """One batch tile of the decoder forward pass.

    feat_ref : (tn, d)        father features (stream dtype)
    p1_ref   : (tn, 6)        [P_father | 1]  (bias column)
    wx_ref   : (d, pad2d+4d)  [fc_h weight (zero-padded to pad2d) | LSTM W_ih x-part]
    wp_ref   : (6, pad2d+4d)  rows 0..4 = [0 | LSTM W_ih P-part], row 5 = fused biases
    whh_ref  : (d, 4d)        LSTM W_hh
    wlr_ref  : (d, 12)        block-diagonal [fc_l | fc_r]
    blr_ref  : (1, 12)        [b_l | b_r]
    out_ref  : (tn, 2d+12)    packed [h1 | c1 | y_act]
    """
    x = feat_ref[...].astype(matmul_dtype)              # (tn, d)
    p1 = p1_ref[...].astype(matmul_dtype)               # (tn, 6)

    # ---- fused [fc_h | LSTM input-hidden] matmul, biases folded into wp ----
    pre = (jnp.dot(x, wx_ref[...], preferred_element_type=jnp.float32)
           + jnp.dot(p1, wp_ref[...], preferred_element_type=jnp.float32))
    # pre: (tn, pad2d + 4d), f32.  [0:pad2d) = fc_h (cols >= 2d are zero),
    # [pad2d:) = LSTM input-hidden gate pre-activations (128-lane aligned).

    z = jnp.maximum(pre[:, :2 * d], 0.0)                 # relu(fc_h)
    h0 = z[:, :d]
    c0 = z[:, d:]

    # ---- LSTMCell gates (bih + bhh already folded into wp row 5) ----
    gates = pre[:, pad2d:] + jnp.dot(h0.astype(matmul_dtype), whh_ref[...],
                                     preferred_element_type=jnp.float32)  # (tn, 4d)
    i_g = jax.nn.sigmoid(gates[:, 0 * d:1 * d])
    f_g = jax.nn.sigmoid(gates[:, 1 * d:2 * d])
    g_g = jnp.tanh(gates[:, 2 * d:3 * d])
    o_g = jax.nn.sigmoid(gates[:, 3 * d:4 * d])
    c1 = f_g * c0 + i_g * g_g                            # (tn, d)
    h1 = o_g * jnp.tanh(c1)                              # (tn, d)

    # ---- fused block-diagonal fc_l / fc_r head ----
    y = jnp.dot(h1.astype(matmul_dtype), wlr_ref[...],
                preferred_element_type=jnp.float32) + blr_ref[...]        # (tn, 12)

    # Lane-masked activations, per head (cols mod 6): 0,1 -> tanh; 2,3,5 -> sigmoid;
    # 4 -> identity.  Matches the PyTorch [xy | wh | a] + isleaf pattern.
    lane6 = jax.lax.broadcasted_iota(jnp.int32, y.shape, 1) % 6
    y_act = jnp.where(lane6 < 2, jnp.tanh(y),
                      jnp.where(lane6 == 4, y, jax.nn.sigmoid(y)))

    # Direct slice stores (no concat / no lane relayout of a packed temp).
    out_ref[:, :d] = h1.astype(out_ref.dtype)
    out_ref[:, d:2 * d] = c1.astype(out_ref.dtype)
    out_ref[:, 2 * d:] = y_act.astype(out_ref.dtype)


# ---------------------------------------------------------------------------
# Parameter prep
# ---------------------------------------------------------------------------
def make_params(key, n_feature):
    """Raw (PyTorch-layout, already transposed to (in, out)) parameters."""
    d = n_feature
    ks = jax.random.split(key, 8)
    scale = 0.1

    def rnd(k, shape):
        return (scale * jax.random.normal(k, shape)).astype(jnp.float32)

    return {
        "wh":  rnd(ks[0], (d, 2 * d)),
        "bh":  rnd(ks[1], (1, 2 * d)),
        "wih": rnd(ks[2], (d + 5, 4 * d)),
        "bih": rnd(ks[3], (1, 4 * d)),
        "whh": rnd(ks[4], (d, 4 * d)),
        "bhh": rnd(ks[5], (1, 4 * d)),
        "wl":  rnd(ks[6], (d // 2, 6)),
        "bl":  jnp.zeros((1, 6), jnp.float32),
        "wr":  rnd(ks[7], (d // 2, 6)),
        "br":  jnp.zeros((1, 6), jnp.float32),
    }


def fuse_params(prm, matmul_dtype=jnp.bfloat16):
    """Pack weights for the kernel (done once, outside the kernel)."""
    d = prm["whh"].shape[0]
    half = d // 2
    pad2d = _round_up(2 * d, 128)          # lane-align the fc_h / gate split

    wih_p = prm["wih"][:5]                 # (5, 4d)  (input is cat(P, x))
    wih_x = prm["wih"][5:]                 # (d, 4d)

    # wx: (d, pad2d + 4d) = [wh | 0-pad | wih_x]
    wx = jnp.zeros((d, pad2d + 4 * d), jnp.float32)
    wx = wx.at[:, :2 * d].set(prm["wh"])
    wx = wx.at[:, pad2d:].set(wih_x)

    # wp: (6, pad2d + 4d); rows 0..4 = P-part of W_ih, row 5 = fused biases
    # (the wrapper appends a constant-1 column to P, so row 5 acts as the bias).
    wp = jnp.zeros((6, pad2d + 4 * d), jnp.float32)
    wp = wp.at[:5, pad2d:].set(wih_p)
    wp = wp.at[5, :2 * d].set(prm["bh"][0])
    wp = wp.at[5, pad2d:].set((prm["bih"] + prm["bhh"])[0])

    # Block-diagonal fc_l / fc_r head.
    wlr = jnp.zeros((d, 12), jnp.float32)
    wlr = wlr.at[:half, :6].set(prm["wl"])
    wlr = wlr.at[half:, 6:].set(prm["wr"])
    blr = jnp.concatenate([prm["bl"], prm["br"]], axis=1)   # (1, 12)

    return {
        "wx":   wx.astype(matmul_dtype),
        "wp":   wp.astype(matmul_dtype),
        "whh":  prm["whh"].astype(matmul_dtype),
        "wlr":  wlr.astype(matmul_dtype),
        "blr":  blr.astype(jnp.float32),
        "pad2d": pad2d,
        "matmul_dtype": matmul_dtype,
    }


# ---------------------------------------------------------------------------
# Wrapper
# ---------------------------------------------------------------------------
def decoder_forward(feature_father, p_father, fused,
                    *, stream_dtype=jnp.bfloat16, max_tile_n=512):
    matmul_dtype = fused["matmul_dtype"]
    pad2d = fused["pad2d"]
    d = fused["whh"].shape[0]
    half = d // 2
    out_w = 2 * d + 12
    n = feature_father.shape[0]

    # Fold the biases into the P matmul: append a constant-1 column.
    p1 = jnp.concatenate([p_father, jnp.ones((n, 1), p_father.dtype)], axis=1)

    # Stream batch-sized arrays in `stream_dtype` (bf16 halves HBM traffic;
    # kernel is HBM/overhead bound at these shapes).
    feat = feature_father.astype(stream_dtype)
    p1 = p1.astype(stream_dtype)

    # Batch tile: sublane multiple (16 for packed bf16, 8 for f32); prefer
    # >= 2 grid steps so v7x's two TensorCores both get work on the
    # "parallel" batch axis.  NOTE(v7x, large d): drop max_tile_n to 256 and
    # set vmem_limit_bytes explicitly if the (tn, pad2d+4d) f32 intermediate
    # outgrows the 64 MiB VMEM.
    sub = 16 if np.dtype(stream_dtype).itemsize < 4 else 8
    tn = min(max_tile_n, _round_up(max(n, 1), sub))
    half_tile = _round_up(_cdiv(max(n, 1), 2), sub)
    if sub <= half_tile < tn:
        tn = half_tile
    n_pad = _round_up(max(n, 1), tn)
    if n_pad != n:
        feat = jnp.pad(feat, ((0, n_pad - n), (0, 0)))
        p1 = jnp.pad(p1, ((0, n_pad - n), (0, 0)))
    grid = (n_pad // tn,)

    def w_spec(w):
        # Whole weight, constant block index -> stays VMEM-resident across the grid.
        return pl.BlockSpec(w.shape, lambda i: (0, 0))

    kernel = functools.partial(decoder_kernel, d=d, pad2d=pad2d,
                               matmul_dtype=matmul_dtype)

    packed = pl.pallas_call(
        kernel,
        out_shape=jax.ShapeDtypeStruct((n_pad, out_w), stream_dtype),
        grid=grid,
        in_specs=[
            pl.BlockSpec((tn, d), lambda i: (i, 0)),      # Feature_father
            pl.BlockSpec((tn, 6), lambda i: (i, 0)),      # [P_father | 1]
            w_spec(fused["wx"]), w_spec(fused["wp"]),
            w_spec(fused["whh"]), w_spec(fused["wlr"]), w_spec(fused["blr"]),
        ],
        out_specs=pl.BlockSpec((tn, out_w), lambda i: (i, 0)),
        compiler_params=pltpu.CompilerParams(
            dimension_semantics=("parallel",)),
    )(feat, p1, fused["wx"], fused["wp"], fused["whh"], fused["wlr"], fused["blr"])

    packed = packed[:n]
    h1 = packed[:, :d]
    c1 = packed[:, d:2 * d]
    y = packed[:, 2 * d:]

    # Regroup into the module's six outputs (wrapper-side layout plumbing).
    left_feature = jnp.concatenate([h1[:, :half], c1[:, :half]], axis=1)
    right_feature = jnp.concatenate([h1[:, half:], c1[:, half:]], axis=1)
    left_P, left_isleaf = y[:, 0:5], y[:, 5:6]
    right_P, right_isleaf = y[:, 6:11], y[:, 11:12]
    return left_feature, left_P, left_isleaf, right_feature, right_P, right_isleaf


# ---------------------------------------------------------------------------
# Pure-JAX reference (mirrors the PyTorch forward exactly)
# ---------------------------------------------------------------------------
def decoder_ref(x, p, prm):
    d = x.shape[1]
    z = jax.nn.relu(x @ prm["wh"] + prm["bh"])
    h0, c0 = z[:, :d], z[:, d:]
    inp = jnp.concatenate([p, x], axis=1)
    gates = inp @ prm["wih"] + prm["bih"] + h0 @ prm["whh"] + prm["bhh"]
    i_g = jax.nn.sigmoid(gates[:, 0 * d:1 * d])
    f_g = jax.nn.sigmoid(gates[:, 1 * d:2 * d])
    g_g = jnp.tanh(gates[:, 2 * d:3 * d])
    o_g = jax.nn.sigmoid(gates[:, 3 * d:4 * d])
    c1 = f_g * c0 + i_g * g_g
    h1 = o_g * jnp.tanh(c1)
    half = d // 2
    h_l, h_r, c_l, c_r = h1[:, :half], h1[:, half:], c1[:, :half], c1[:, half:]
    y_l = h_l @ prm["wl"] + prm["bl"]
    y_r = h_r @ prm["wr"] + prm["br"]

    def head(y):
        return (jnp.concatenate([jnp.tanh(y[:, :2]), jax.nn.sigmoid(y[:, 2:4]),
                                 y[:, 4:5]], 1),
                jax.nn.sigmoid(y[:, 5:6]))

    lp, lil = head(y_l)
    rp, ril = head(y_r)
    return (jnp.concatenate([h_l, c_l], 1), lp, lil,
            jnp.concatenate([h_r, c_r], 1), rp, ril)


# ---------------------------------------------------------------------------
if __name__ == "__main__":
    n_feature = 16
    batch = 8

    key = jax.random.PRNGKey(0)
    k_feat, k_p, k_prm = jax.random.split(key, 3)
    feature_father = jax.random.normal(k_feat, (batch, n_feature), dtype=jnp.float32)
    p_father = jax.random.normal(k_p, (batch, 5), dtype=jnp.float32)
    params = make_params(k_prm, n_feature)
    refs = decoder_ref(feature_father, p_father, params)

    # --- f32 path (tight-accuracy validation) ---
    fused_f32 = fuse_params(params, jnp.float32)
    outs = decoder_forward(feature_father, p_father, fused_f32,
                           stream_dtype=jnp.float32)
    outs = jax.block_until_ready(outs)
    for o, r in zip(outs, refs):
        assert o.shape == r.shape, (o.shape, r.shape)
        assert jnp.allclose(o.astype(jnp.float32), r, atol=1e-4, rtol=1e-4), \
            "f32 mismatch vs reference"

    # --- bf16 streaming + bf16 matmul path (default for v5e / v6e / v7x) ---
    fused_bf16 = fuse_params(params, jnp.bfloat16)
    outs_bf16 = decoder_forward(feature_father, p_father, fused_bf16,
                                stream_dtype=jnp.bfloat16)
    outs_bf16 = jax.block_until_ready(outs_bf16)
    for o, r in zip(outs_bf16, refs):
        assert o.shape == r.shape, (o.shape, r.shape)
        assert jnp.allclose(o.astype(jnp.float32), r, atol=1e-1, rtol=1e-1), \
            "bf16 mismatch vs reference"

    print("KERNEL_OK")
</pallas_src>

<mosaic_0001>
module attributes {stable_mosaic.version = 11 : i64} {
  func.func @decoder_kernel(%arg0: i32, %arg1: memref<8x16xf32, #tpu.memory_space<vmem>>, %arg2: memref<8x6xf32, #tpu.memory_space<vmem>>, %arg3: memref<16x192xf32, #tpu.memory_space<vmem>>, %arg4: memref<6x192xf32, #tpu.memory_space<vmem>>, %arg5: memref<16x64xf32, #tpu.memory_space<vmem>>, %arg6: memref<16x12xf32, #tpu.memory_space<vmem>>, %arg7: memref<1x12xf32, #tpu.memory_space<vmem>>, %arg8: memref<8x44xf32, #tpu.memory_space<vmem>>) attributes {dimension_semantics = [#tpu.dimension_semantics<parallel>], iteration_bounds = array<i64: 1>, scalar_prefetch = 0 : i64, scratch_operands = 0 : i64, tpu.core_type = #tpu.core_type<tc>, window_params = [{transform_indices = @transform_0, window_bounds = array<i64: 8, 16>}, {transform_indices = @transform_1, window_bounds = array<i64: 8, 6>}, {pipeline_mode = #tpu.pipeline_mode<synchronous>, transform_indices = @transform_2, window_bounds = array<i64: 16, 192>}, {pipeline_mode = #tpu.pipeline_mode<synchronous>, transform_indices = @transform_3, window_bounds = array<i64: 6, 192>}, {pipeline_mode = #tpu.pipeline_mode<synchronous>, transform_indices = @transform_4, window_bounds = array<i64: 16, 64>}, {pipeline_mode = #tpu.pipeline_mode<synchronous>, transform_indices = @transform_5, window_bounds = array<i64: 16, 12>}, {pipeline_mode = #tpu.pipeline_mode<synchronous>, transform_indices = @transform_6, window_bounds = array<i64: 1, 12>}, {transform_indices = @transform_7, window_bounds = array<i64: 8, 44>}]} {
    %c0 = arith.constant 0 : index
    %c0_0 = arith.constant 0 : index
    %0 = vector.load %arg1[%c0, %c0_0] : memref<8x16xf32, #tpu.memory_space<vmem>>, vector<8x16xf32>
    %c0_1 = arith.constant 0 : index
    %c0_2 = arith.constant 0 : index
    %1 = vector.load %arg2[%c0_1, %c0_2] : memref<8x6xf32, #tpu.memory_space<vmem>>, vector<8x6xf32>
    %c0_3 = arith.constant 0 : index
    %c0_4 = arith.constant 0 : index
    %2 = vector.load %arg3[%c0_3, %c0_4] : memref<16x192xf32, #tpu.memory_space<vmem>>, vector<16x192xf32>
    %cst = arith.constant dense<0.000000e+00> : vector<8x192xf32>
    %3 = tpu.matmul %0, %2, %cst {dimension_numbers = #tpu.dot_dimension_numbers<[1], [0], [0], [1], [0, 0, 1, 1], [], []>} : vector<8x16xf32>, vector<16x192xf32>, vector<8x192xf32> -> vector<8x192xf32>
    %c0_5 = arith.constant 0 : index
    %c0_6 = arith.constant 0 : index
    %4 = vector.load %arg4[%c0_5, %c0_6] : memref<6x192xf32, #tpu.memory_space<vmem>>, vector<6x192xf32>
    %cst_7 = arith.constant dense<0.000000e+00> : vector<8x192xf32>
    %5 = tpu.matmul %1, %4, %cst_7 {dimension_numbers = #tpu.dot_dimension_numbers<[1], [0], [0], [1], [0, 0, 1, 1], [], []>} : vector<8x6xf32>, vector<6x192xf32>, vector<8x192xf32> -> vector<8x192xf32>
    %6 = arith.addf %3, %5 : vector<8x192xf32>
    %7 = vector.extract_strided_slice %6 {offsets = [0, 0], sizes = [8, 32], strides = [1, 1]} : vector<8x192xf32> to vector<8x32xf32>
    %cst_8 = arith.constant 0.000000e+00 : f32
    %8 = vector.broadcast %cst_8 : f32 to vector<8x32xf32>
    %9 = arith.maximumf %7, %8 : vector<8x32xf32>
    %10 = vector.extract_strided_slice %9 {offsets = [0, 0], sizes = [8, 16], strides = [1, 1]} : vector<8x32xf32> to vector<8x16xf32>
    %11 = vector.extract_strided_slice %9 {offsets = [0, 16], sizes = [8, 16], strides = [1, 1]} : vector<8x32xf32> to vector<8x16xf32>
    %12 = vector.extract_strided_slice %6 {offsets = [0, 128], sizes = [8, 64], strides = [1, 1]} : vector<8x192xf32> to vector<8x64xf32>
    %c0_9 = arith.constant 0 : index
    %c0_10 = arith.constant 0 : index
    %13 = vector.load %arg5[%c0_9, %c0_10] : memref<16x64xf32, #tpu.memory_space<vmem>>, vector<16x64xf32>
    %cst_11 = arith.constant dense<0.000000e+00> : vector<8x64xf32>
    %14 = tpu.matmul %10, %13, %cst_11 {dimension_numbers = #tpu.dot_dimension_numbers<[1], [0], [0], [1], [0, 0, 1, 1], [], []>} : vector<8x16xf32>, vector<16x64xf32>, vector<8x64xf32> -> vector<8x64xf32>
    %15 = arith.addf %12, %14 : vector<8x64xf32>
    %16 = vector.extract_strided_slice %15 {offsets = [0, 0], sizes = [8, 16], strides = [1, 1]} : vector<8x64xf32> to vector<8x16xf32>
    %17 = arith.negf %16 : vector<8x16xf32>
    %18 = math.exp %17 : vector<8x16xf32>
    %cst_12 = arith.constant 1.000000e+00 : f32
    %19 = vector.broadcast %cst_12 : f32 to vector<8x16xf32>
    %20 = arith.addf %19, %18 : vector<8x16xf32>
    %21 = arith.divf %19, %20 : vector<8x16xf32>
    %22 = vector.extract_strided_slice %15 {offsets = [0, 16], sizes = [8, 16], strides = [1, 1]} : vector<8x64xf32> to vector<8x16xf32>
    %23 = arith.negf %22 : vector<8x16xf32>
    %24 = math.exp %23 : vector<8x16xf32>
    %cst_13 = arith.constant 1.000000e+00 : f32
    %25 = vector.broadcast %cst_13 : f32 to vector<8x16xf32>
    %26 = arith.addf %25, %24 : vector<8x16xf32>
    %27 = arith.divf %25, %26 : vector<8x16xf32>
    %28 = vector.extract_strided_slice %15 {offsets = [0, 32], sizes = [8, 16], strides = [1, 1]} : vector<8x64xf32> to vector<8x16xf32>
    %29 = math.tanh %28 : vector<8x16xf32>
    %30 = vector.extract_strided_slice %15 {offsets = [0, 48], sizes = [8, 16], strides = [1, 1]} : vector<8x64xf32> to vector<8x16xf32>
    %31 = arith.negf %30 : vector<8x16xf32>
    %32 = math.exp %31 : vector<8x16xf32>
    %cst_14 = arith.constant 1.000000e+00 : f32
    %33 = vector.broadcast %cst_14 : f32 to vector<8x16xf32>
    %34 = arith.addf %33, %32 : vector<8x16xf32>
    %35 = arith.divf %33, %34 : vector<8x16xf32>
    %36 = arith.mulf %27, %11 : vector<8x16xf32>
    %37 = arith.mulf %21, %29 : vector<8x16xf32>
    %38 = arith.addf %36, %37 : vector<8x16xf32>
    %39 = math.tanh %38 : vector<8x16xf32>
    %40 = arith.mulf %35, %39 : vector<8x16xf32>
    %c0_15 = arith.constant 0 : index
    %c0_16 = arith.constant 0 : index
    %41 = vector.load %arg6[%c0_15, %c0_16] : memref<16x12xf32, #tpu.memory_space<vmem>>, vector<16x12xf32>
    %cst_17 = arith.constant dense<0.000000e+00> : vector<8x12xf32>
    %42 = tpu.matmul %40, %41, %cst_17 {dimension_numbers = #tpu.dot_dimension_numbers<[1], [0], [0], [1], [0, 0, 1, 1], [], []>} : vector<8x16xf32>, vector<16x12xf32>, vector<8x12xf32> -> vector<8x12xf32>
    %c0_18 = arith.constant 0 : index
    %c0_19 = arith.constant 0 : index
    %43 = vector.load %arg7[%c0_18, %c0_19] : memref<1x12xf32, #tpu.memory_space<vmem>>, vector<1x12xf32>
    %44 = vector.broadcast %43 : vector<1x12xf32> to vector<8x12xf32>
    %45 = arith.addf %42, %44 : vector<8x12xf32>
    %46 = tpu.iota {dimensions = array<i32: 1>} : vector<8x12xi32>
    %c6_i32 = arith.constant 6 : i32
    %c0_i32 = arith.constant 0 : i32
    %47 = arith.cmpi eq, %c6_i32, %c0_i32 : i32
    %c1_i32 = arith.constant 1 : i32
    %48 = arith.select %47, %c1_i32, %c6_i32 : i32
    %49 = vector.broadcast %48 : i32 to vector<8x12xi32>
    %50 = arith.remsi %46, %49 : vector<8x12xi32>
    %c0_i32_20 = arith.constant 0 : i32
    %51 = vector.broadcast %c0_i32_20 : i32 to vector<8x12xi32>
    %52 = arith.cmpi ne, %50, %51 : vector<8x12xi32>
    %c0_i32_21 = arith.constant 0 : i32
    %53 = vector.broadcast %c0_i32_21 : i32 to vector<8x12xi32>
    %54 = arith.cmpi slt, %50, %53 : vector<8x12xi32>
    %c0_i32_22 = arith.constant 0 : i32
    %55 = arith.cmpi slt, %48, %c0_i32_22 : i32
    %56 = vector.broadcast %55 : i1 to vector<8x12xi1>
    %57 = vector.broadcast %56 : vector<8x12xi1> to vector<8x12xi1>
    %58 = arith.xori %54, %57 : vector<8x12xi1>
    %59 = arith.andi %58, %52 : vector<8x12xi1>
    %60 = vector.broadcast %48 : i32 to vector<8x12xi32>
    %61 = arith.addi %50, %60 : vector<8x12xi32>
    %62 = arith.select %59, %61, %50 : vector<8x12xi1>, vector<8x12xi32>
    %c2_i32 = arith.constant 2 : i32
    %63 = vector.broadcast %c2_i32 : i32 to vector<8x12xi32>
    %64 = arith.cmpi slt, %62, %63 : vector<8x12xi32>
    %65 = math.tanh %45 : vector<8x12xf32>
    %c4_i32 = arith.constant 4 : i32
    %66 = vector.broadcast %c4_i32 : i32 to vector<8x12xi32>
    %67 = arith.cmpi eq, %62, %66 : vector<8x12xi32>
    %68 = arith.negf %45 : vector<8x12xf32>
    %69 = math.exp %68 : vector<8x12xf32>
    %cst_23 = arith.constant 1.000000e+00 : f32
    %70 = vector.broadcast %cst_23 : f32 to vector<8x12xf32>
    %71 = arith.addf %70, %69 : vector<8x12xf32>
    %72 = arith.divf %70, %71 : vector<8x12xf32>
    %73 = arith.select %67, %45, %72 : vector<8x12xi1>, vector<8x12xf32>
    %74 = arith.select %64, %65, %73 : vector<8x12xi1>, vector<8x12xf32>
    %c0_24 = arith.constant 0 : index
    %c0_25 = arith.constant 0 : index
    %75 = vector.load %arg8[%c0_24, %c0_25] : memref<8x44xf32, #tpu.memory_space<vmem>>, vector<8x16xf32>
    tpu.vector_store %arg8[%c0_24, %c0_25], %40 {strides = array<i32>} : memref<8x44xf32, #tpu.memory_space<vmem>>, vector<8x16xf32>,
    %c0_26 = arith.constant 0 : index
    %c16 = arith.constant 16 : index
    %76 = vector.load %arg8[%c0_26, %c16] : memref<8x44xf32, #tpu.memory_space<vmem>>, vector<8x16xf32>
    tpu.vector_store %arg8[%c0_26, %c16], %38 {strides = array<i32>} : memref<8x44xf32, #tpu.memory_space<vmem>>, vector<8x16xf32>,
    %c0_27 = arith.constant 0 : index
    %c32 = arith.constant 32 : index
    %77 = vector.load %arg8[%c0_27, %c32] : memref<8x44xf32, #tpu.memory_space<vmem>>, vector<8x12xf32>
    tpu.vector_store %arg8[%c0_27, %c32], %74 {strides = array<i32>} : memref<8x44xf32, #tpu.memory_space<vmem>>, vector<8x12xf32>,
    return
  }
  func.func @transform_0(%arg0: i32) -> (i32, i32) {
    %c0_i32 = arith.constant 0 : i32
    %c0_i32_0 = arith.constant 0 : i32
    return %arg0, %c0_i32 : i32, i32
  }
  func.func @transform_1(%arg0: i32) -> (i32, i32) {
    %c0_i32 = arith.constant 0 : i32
    %c0_i32_0 = arith.constant 0 : i32
    return %arg0, %c0_i32 : i32, i32
  }
  func.func @transform_2(%arg0: i32) -> (i32, i32) {
    %c0_i32 = arith.constant 0 : i32
    %c0_i32_0 = arith.constant 0 : i32
    %c0_i32_1 = arith.constant 0 : i32
    return %c0_i32, %c0_i32_0 : i32, i32
  }
  func.func @transform_3(%arg0: i32) -> (i32, i32) {
    %c0_i32 = arith.constant 0 : i32
    %c0_i32_0 = arith.constant 0 : i32
    %c0_i32_1 = arith.constant 0 : i32
    return %c0_i32, %c0_i32_0 : i32, i32
  }
  func.func @transform_4(%arg0: i32) -> (i32, i32) {
    %c0_i32 = arith.constant 0 : i32
    %c0_i32_0 = arith.constant 0 : i32
    %c0_i32_1 = arith.constant 0 : i32
    return %c0_i32, %c0_i32_0 : i32, i32
  }
  func.func @transform_5(%arg0: i32) -> (i32, i32) {
    %c0_i32 = arith.constant 0 : i32
    %c0_i32_0 = arith.constant 0 : i32
    %c0_i32_1 = arith.constant 0 : i32
    return %c0_i32, %c0_i32_0 : i32, i32
  }
  func.func @transform_6(%arg0: i32) -> (i32, i32) {
    %c0_i32 = arith.constant 0 : i32
    %c0_i32_0 = arith.constant 0 : i32
    %c0_i32_1 = arith.constant 0 : i32
    return %c0_i32, %c0_i32_0 : i32, i32
  }
  func.func @transform_7(%arg0: i32) -> (i32, i32) {
    %c0_i32 = arith.constant 0 : i32
    %c0_i32_0 = arith.constant 0 : i32
    return %arg0, %c0_i32 : i32, i32
  }
}

</mosaic_0001>

<llo_original>
// kernel: tpu_custom_call.1
$region0: #{tpu_custom_call.1}
  #allocation0 [shape = 'u32[]', space=smem, size = 0x4, offset = 0x4, fixed_abs, tag = 'smem constant byte address 0x4 - core index']
  #allocation1 [shape = 'u32[72,128]{1,0:T(1,128)}', space=vmem, size = 0x9000, scoped, tag = 'internal scratch']
  %s0 = inlined_call_operand.hbm [shape: f32[8,16], index: 0, kind: input, shape index: {}]
  %s1 = inlined_call_operand.hbm [shape: f32[8,6], index: 1, kind: input, shape index: {}]
  %s2 = inlined_call_operand.hbm [shape: f32[16,192], index: 2, kind: input, shape index: {}]
  %s3 = inlined_call_operand.hbm [shape: f32[6,192], index: 3, kind: input, shape index: {}]
  %s4 = inlined_call_operand.hbm [shape: f32[16,64], index: 4, kind: input, shape index: {}]
  %s5 = inlined_call_operand.hbm [shape: f32[16,12], index: 5, kind: input, shape index: {}]
  %s6 = inlined_call_operand.vmem [shape: f32[1,12], index: 6, kind: input, shape index: {}]
  %s7 = inlined_call_operand.hbm [shape: f32[8,44], index: 7, kind: output, shape index: {}]
  %s8 = sld [smem:[#allocation0]]
  $region62: #{tpu_custom_call.1} parent=0
    _
  %s10 = ssub.s32 1, %s8
  %s11 = scalar_select 0, %s10, %s8
  $region1: #{tpu_custom_call.1} parent=0
    #allocation2 [shape = 'u8[4096]{0}', space=vmem, size = 0x1000, scoped, tag = 'input window, operand 0, single buffered']
    #allocation3 [shape = 's32[1]{0}', space=sflag, size = 0x4, scoped, tag = 'scoped memory for tpu_custom_call.1']
    #allocation4 [shape = 's32[1]{0}', space=sflag, size = 0x4, scoped, tag = 'scoped memory for tpu_custom_call.1']
    #allocation5 [shape = 'u8[4096]{0}', space=vmem, size = 0x1000, scoped, tag = 'input window, operand 1, single buffered']
    #allocation6 [shape = 's32[1]{0}', space=sflag, size = 0x4, scoped, tag = 'scoped memory for tpu_custom_call.1']
    #allocation7 [shape = 'u8[16384]{0}', space=vmem, size = 0x4000, scoped, tag = 'input window, operand 2, single buffered']
    #allocation8 [shape = 'u8[8192]{0}', space=vmem, size = 0x2000, scoped, tag = 'input window, operand 3, single buffered']
    #allocation9 [shape = 's32[1]{0}', space=sflag, size = 0x4, scoped, tag = 'scoped memory for tpu_custom_call.1']
    #allocation10 [shape = 'u8[8192]{0}', space=vmem, size = 0x2000, scoped, tag = 'input window, operand 4, single buffered']
    #allocation11 [shape = 'u8[8192]{0}', space=vmem, size = 0x2000, scoped, tag = 'input window, operand 5, single buffered']
    #allocation12 [shape = 's32[1]{0}', space=sflag, size = 0x4, scoped, tag = 'scoped memory for tpu_custom_call.1']
    #allocation13 [shape = 'u8[4096]{0}', space=vmem, size = 0x1000, scoped, tag = 'output window, operand 0, single buffered']
    %12 = vsyncpa [#allocation3], 0
    %13 = vsyncpa [#allocation6], 0
    %14 = vsyncpa [#allocation9], 0
    %15 = vsyncpa [#allocation12], 0
    %16 = vsyncpa [#allocation4], 0
    // Predicated region
    $region2: #{tpu_custom_call.1} parent=1 // pred_check
      _
    $region3: #{tpu_custom_call.1} parent=1 // pred_check_branch
      %18 = sbr.rel (0) target = $region5
    $region4: #{tpu_custom_call.1} parent=1 // pred_region
      %20 = vsyncadd [#allocation3], 0
      %s22 = sshll.u32 %s0, 4
      %s23 = int_to_ptr.hbm [resolvable:$true] %s22
      %s24 = sshll.u32 [#allocation2], 4
      %s25 = int_to_ptr.vmem [resolvable:$true] %s24
      %27 = dma.hbm_to_vmem [thread:$0]  %s23, 128, %s25, [#allocation3]
    $region5: #{tpu_custom_call.1} parent=1 // pred_fallthru
      _
    // Predicated region
    $region6: #{tpu_custom_call.1} parent=1 // pred_check
      _
    $region7: #{tpu_custom_call.1} parent=1 // pred_check_branch
      %29 = sbr.rel (0) target = $region9
    $region8: #{tpu_custom_call.1} parent=1 // pred_region
      %31 = vsyncadd [#allocation6], 0
      %s33 = sshll.u32 %s1, 4
      %s34 = int_to_ptr.hbm [resolvable:$true] %s33
      %s35 = sshll.u32 [#allocation5], 4
      %s36 = int_to_ptr.vmem [resolvable:$true] %s35
      %38 = dma.hbm_to_vmem [thread:$0]  %s34, 128, %s36, [#allocation6]
    $region9: #{tpu_custom_call.1} parent=1 // pred_fallthru
      _
    // Predicated region
    $region10: #{tpu_custom_call.1} parent=1 // pred_check
      _
    $region11: #{tpu_custom_call.1} parent=1 // pred_check_branch
      %40 = sbr.rel (0) target = $region13
    $region12: #{tpu_custom_call.1} parent=1 // pred_region
      %42 = vsyncadd [#allocation6], 0
      %s43 = sshll.u32 %s2, 4
      %s44 = int_to_ptr.hbm [resolvable:$true] %s43
      %s45 = sshll.u32 [#allocation7], 4
      %s46 = int_to_ptr.vmem [resolvable:$true] %s45
      %51 = dma.hbm_to_vmem [thread:$0]  %s44, 512, %s46, [#allocation6], 256, 256, 16
    $region13: #{tpu_custom_call.1} parent=1 // pred_fallthru
      _
    // Predicated region
    $region14: #{tpu_custom_call.1} parent=1 // pred_check
      _
    $region15: #{tpu_custom_call.1} parent=1 // pred_check_branch
      %53 = sbr.rel (0) target = $region17
    $region16: #{tpu_custom_call.1} parent=1 // pred_region
      %55 = vsyncadd [#allocation9], 0
      %s57 = sshll.u32 %s3, 4
      %s58 = int_to_ptr.hbm [resolvable:$true] %s57
      %s59 = sshll.u32 [#allocation8], 4
      %s60 = int_to_ptr.vmem [resolvable:$true] %s59
      %62 = dma.hbm_to_vmem [thread:$0]  %s58, 256, %s60, [#allocation9]
    $region17: #{tpu_custom_call.1} parent=1 // pred_fallthru
      _
    // Predicated region
    $region18: #{tpu_custom_call.1} parent=1 // pred_check
      _
    $region19: #{tpu_custom_call.1} parent=1 // pred_check_branch
      %64 = sbr.rel (0) target = $region21
    $region20: #{tpu_custom_call.1} parent=1 // pred_region
      %66 = vsyncadd [#allocation9], 0
      %s67 = sshll.u32 %s4, 4
      %s68 = int_to_ptr.hbm [resolvable:$true] %s67
      %s69 = sshll.u32 [#allocation10], 4
      %s70 = int_to_ptr.vmem [resolvable:$true] %s69
      %75 = dma.hbm_to_vmem [thread:$0]  %s68, 256, %s70, [#allocation9], 128, 128, 8
    $region21: #{tpu_custom_call.1} parent=1 // pred_fallthru
      _
    // Predicated region
    $region22: #{tpu_custom_call.1} parent=1 // pred_check
      _
    $region23: #{tpu_custom_call.1} parent=1 // pred_check_branch
      %77 = sbr.rel (0) target = $region25
    $region24: #{tpu_custom_call.1} parent=1 // pred_region
      %79 = vsyncadd [#allocation12], 0
      %s80 = sshll.u32 %s5, 4
      %s81 = int_to_ptr.hbm [resolvable:$true] %s80
      %s82 = sshll.u32 [#allocation11], 4
      %s83 = int_to_ptr.vmem [resolvable:$true] %s82
      %88 = dma.hbm_to_vmem [thread:$0]  %s81, 256, %s83, [#allocation12], 128, 128, 8
    $region25: #{tpu_custom_call.1} parent=1 // pred_fallthru
      _
    // Predicated region
    $region26: #{tpu_custom_call.1} parent=1 // pred_check
      _
    $region27: #{tpu_custom_call.1} parent=1 // pred_check_branch
      %90 = sbr.rel (0) target = $region29
    $region28: #{tpu_custom_call.1} parent=1 // pred_region
      _
    $region29: #{tpu_custom_call.1} parent=1 // pred_fallthru
      _
    // Predicated region
    $region30: #{tpu_custom_call.1} parent=1 // pred_check
      _
    $region31: #{tpu_custom_call.1} parent=1 // pred_check_branch
      %92 = sbr.rel (0) target = $region33
    $region32: #{tpu_custom_call.1} parent=1 // pred_region
      %94 = dma.done [#allocation3], 128
    $region33: #{tpu_custom_call.1} parent=1 // pred_fallthru
      _
    // Predicated region
    $region34: #{tpu_custom_call.1} parent=1 // pred_check
      _
    $region35: #{tpu_custom_call.1} parent=1 // pred_check_branch
      %96 = sbr.rel (0) target = $region37
    $region36: #{tpu_custom_call.1} parent=1 // pred_region
      %98 = dma.done [#allocation6], 128
    $region37: #{tpu_custom_call.1} parent=1 // pred_fallthru
      _
    // Predicated region
    $region38: #{tpu_custom_call.1} parent=1 // pred_check
      _
    $region39: #{tpu_custom_call.1} parent=1 // pred_check_branch
      %100 = sbr.rel (0) target = $region41
    $region40: #{tpu_custom_call.1} parent=1 // pred_region
      %102 = dma.done [#allocation6], 512
    $region41: #{tpu_custom_call.1} parent=1 // pred_fallthru
      _
    // Predicated region
    $region42: #{tpu_custom_call.1} parent=1 // pred_check
      _
    $region43: #{tpu_custom_call.1} parent=1 // pred_check_branch
      %104 = sbr.rel (0) target = $region45
    $region44: #{tpu_custom_call.1} parent=1 // pred_region
      %106 = dma.done [#allocation9], 256
    $region45: #{tpu_custom_call.1} parent=1 // pred_fallthru
      _
    // Predicated region
    $region46: #{tpu_custom_call.1} parent=1 // pred_check
      _
    $region47: #{tpu_custom_call.1} parent=1 // pred_check_branch
      %108 = sbr.rel (0) target = $region49
    $region48: #{tpu_custom_call.1} parent=1 // pred_region
      %110 = dma.done [#allocation9], 256
    $region49: #{tpu_custom_call.1} parent=1 // pred_fallthru
      _
    // Predicated region
    $region50: #{tpu_custom_call.1} parent=1 // pred_check
      _
    $region51: #{tpu_custom_call.1} parent=1 // pred_check_branch
      %112 = sbr.rel (0) target = $region53
    $region52: #{tpu_custom_call.1} parent=1 // pred_region
      %114 = dma.done [#allocation12], 256
    $region53: #{tpu_custom_call.1} parent=1 // pred_fallthru
      _
    %v115 = vld [vmem:[#allocation2] sm:$0xff]
    %v116 = vld [vmem:[#allocation5] sm:$0xff]
    %v117 = vld [vmem:[#allocation7] sm:$0xff]
    %v118 = vld [vmem:[#allocation7 + $0x8] sm:$0xff]
    %v119 = vld [vmem:[#allocation7 + $0x10] sm:$0xff]
    %v120 = vld [vmem:[#allocation7 + $0x18] sm:$0xff]
    %v121 = vld [vmem:[#allocation8] sm:$0x3f]
    %v122 = vld [vmem:[#allocation8 + $0x8] sm:$0x3f]
    %vm123 = vcmask 48128
    %v125 = vsel %vm123, %v116, 0
    %vm127 = vcmask 1045504
    %v129 = vsel %vm127, %v121, 0
    %v132 = vsel %vm127, %v122, 0
    %134 = vmatpush.msra.mxu0 0.0
    %135 = vmatpush.msra.mxu0 0.0
    %136 = vmatpush.msra.mxu0 0.0
    %137 = vmatpush.msra.mxu0 0.0
    %138 = vmatpush.msra.mxu0 0.0
    %139 = vmatpush.msra.mxu0 0.0
    %140 = vmatpush.msra.mxu0 0.0
    %141 = vmatpush.msra.mxu0 0.0
    %142 = vmatpush.msra.mxu0 0.0
    %143 = vmatpush.msra.mxu0 0.0
    %144 = vmatpush.msra.mxu0 0.0
    %145 = vmatpush.msra.mxu0 0.0
    %146 = vmatpush.msra.mxu0 0.0
    %147 = vmatpush.msra.mxu0 0.0
    %148 = vmatpush.msra.mxu0 0.0
    %149 = vmatpush.msra.mxu0 %v129
    %150 = vmatmul.f32.gmra.mxu0 %v125
    %v151 = vpop.f32.mrf.mxu0
    %v152 = vadd.f32 0.0, %v151
    %153 = vdwg.mxu0
    %154 = vmatpush.msra.mxu0 0.0
    %155 = vmatpush.msra.mxu0 0.0
    %156 = vmatpush.msra.mxu0 0.0
    %157 = vmatpush.msra.mxu0 0.0
    %158 = vmatpush.msra.mxu0 0.0
    %159 = vmatpush.msra.mxu0 0.0
    %160 = vmatpush.msra.mxu0 0.0
    %161 = vmatpush.msra.mxu0 0.0
    %162 = vmatpush.msra.mxu0 0.0
    %163 = vmatpush.msra.mxu0 0.0
    %164 = vmatpush.msra.mxu0 0.0
    %165 = vmatpush.msra.mxu0 0.0
    %166 = vmatpush.msra.mxu0 0.0
    %167 = vmatpush.msra.mxu0 0.0
    %168 = vmatpush.msra.mxu0 0.0
    %169 = vmatpush.msra.mxu0 %v132
    %170 = vmatmul.f32.gmra.mxu0 %v125
    %v171 = vpop.f32.mrf.mxu0
    %v172 = vadd.f32 0.0, %v171
    %173 = vdwg.mxu0
    %vm174 = vcmask 130048
    %v176 = vsel %vm174, %v115, 0
    %178 = vmatpush.msra.mxu0 0.0
    %179 = vmatpush.msra.mxu0 0.0
    %180 = vmatpush.msra.mxu0 0.0
    %181 = vmatpush.msra.mxu0 0.0
    %182 = vmatpush.msra.mxu0 0.0
    %183 = vmatpush.msra.mxu0 0.0
    %184 = vmatpush.msra.mxu0 0.0
    %185 = vmatpush.msra.mxu0 0.0
    %186 = vmatpush.msra.mxu0 0.0
    %187 = vmatpush.msra.mxu0 0.0
    %188 = vmatpush.msra.mxu0 0.0
    %189 = vmatpush.msra.mxu0 0.0
    %190 = vmatpush.msra.mxu0 0.0
    %191 = vmatpush.msra.mxu0 0.0
    %192 = vmatpush.msra.mxu0 %v119
    %193 = vmatpush.msra.mxu0 %v117
    %194 = vmatmul.f32.gmra.mxu0 %v176
    %v195 = vpop.f32.mrf.mxu0
    %v196 = vadd.f32 %v152, %v195
    %197 = vdwg.mxu0
    %198 = vmatpush.msra.mxu0 0.0
    %199 = vmatpush.msra.mxu0 0.0
    %200 = vmatpush.msra.mxu0 0.0
    %201 = vmatpush.msra.mxu0 0.0
    %202 = vmatpush.msra.mxu0 0.0
    %203 = vmatpush.msra.mxu0 0.0
    %204 = vmatpush.msra.mxu0 0.0
    %205 = vmatpush.msra.mxu0 0.0
    %206 = vmatpush.msra.mxu0 0.0
    %207 = vmatpush.msra.mxu0 0.0
    %208 = vmatpush.msra.mxu0 0.0
    %209 = vmatpush.msra.mxu0 0.0
    %210 = vmatpush.msra.mxu0 0.0
    %211 = vmatpush.msra.mxu0 0.0
    %212 = vmatpush.msra.mxu0 %v120
    %213 = vmatpush.msra.mxu0 %v118
    %214 = vmatmul.f32.gmra.mxu0 %v176
    %v215 = vpop.f32.mrf.mxu0
    %v216 = vadd.f32 %v172, %v215
    %217 = vdwg.mxu0
    %v218 = vmax.f32 %v196, 0.0
    %v219 = vld [vmem:[#allocation10] sm:$0xff]
    %v220 = vld [vmem:[#allocation10 + $0x8] sm:$0xff]
    %v222 = vsel %vm174, %v218, 0
    %224 = vmatpush.msra.mxu0 0.0
    %225 = vmatpush.msra.mxu0 0.0
    %226 = vmatpush.msra.mxu0 0.0
    %227 = vmatpush.msra.mxu0 0.0
    %228 = vmatpush.msra.mxu0 0.0
    %229 = vmatpush.msra.mxu0 0.0
    %230 = vmatpush.msra.mxu0 0.0
    %231 = vmatpush.msra.mxu0 0.0
    %232 = vmatpush.msra.mxu0 0.0
    %233 = vmatpush.msra.mxu0 0.0
    %234 = vmatpush.msra.mxu0 0.0
    %235 = vmatpush.msra.mxu0 0.0
    %236 = vmatpush.msra.mxu0 0.0
    %237 = vmatpush.msra.mxu0 0.0
    %238 = vmatpush.msra.mxu0 %v220
    %239 = vmatpush.msra.mxu0 %v219
    %240 = vmatmul.f32.gmra.mxu0 %v222
    %v241 = vpop.f32.mrf.mxu0
    %v242 = vadd.f32 0.0, %v241
    %243 = vdwg.mxu0
    %v244 = vadd.f32 %v216, %v242
    %v245 = vxor.u32 %v244, 2147483648
    %v246 = vmul.f32 %v245, 1.442695
    %v247 = vpow.pop %v246
    %v248 = vadd.f32 %v247, 1.0
    %v249 = vrcp.pop %v248
    %v250 = vmul.f32 %v248, %v249
    %v251 = vsub.f32 1.0, %v250
    %v252 = vmul.f32 %v249, %v251
    %v253 = vadd.f32 %v249, %v252
    %vm254 = vweird.f32 %v248
    %vm255 = vweird.f32 %v249
    %vm256 = vmor %vm254, %vm255
    %v257 = vsel %vm256, %v249, %v253
    %v258 = vand.u32 2147483647, %v248
    %vm259 = vcmp.eq.f32.partialorder %v258, 8.507059e+37
    %v260 = vand.u32 %v248, 2147483648
    %v261 = vor.u32 1.1754944e-38, %v260
    %v262 = vsel %vm259, %v261, %v257
    %v263 = vmul.f32 1.0, %v262
    %v264 = vtanh.pop %v244
    %v265 = vmul.f32 %v263, %v218
    %267 = vrot.lane.b32.xlu0 %v264, 96
    %v268 = vpop.permute.xlu0 %267
    %v270 = vmul.f32 %v263, %v268
    %272 = vrot.lane.b32.xlu0 %v270, 16
    %v273 = vpop.permute.xlu0 %272
    %v275 = vadd.f32 %v265, %v273
    %v276 = vtanh.pop %v275
    %278 = vrot.lane.b32.xlu0 %v276, 32
    %v279 = vpop.permute.xlu0 %278
    %v281 = vmul.f32 %v263, %v279
    %v282 = vld [vmem:[#allocation11] sm:$0xff]
    %v283 = vld [vmem:[#allocation11 + $0x8] sm:$0xff]
    %v284 = vld [vmem:[%s6] sm:$0x1]
    %v286 = vperm.slane %v284, 0
    %289 = vrot.lane.b32.xlu0 %v281, 80
    %v290 = vpop.permute.xlu0 %289
    %v291 = vsel %vm174, %v290, 0
    %293 = vmatpush.msra.mxu0 0.0
    %294 = vmatpush.msra.mxu0 0.0
    %295 = vmatpush.msra.mxu0 0.0
    %296 = vmatpush.msra.mxu0 0.0
    %297 = vmatpush.msra.mxu0 0.0
    %298 = vmatpush.msra.mxu0 0.0
    %299 = vmatpush.msra.mxu0 0.0
    %300 = vmatpush.msra.mxu0 0.0
    %301 = vmatpush.msra.mxu0 0.0
    %302 = vmatpush.msra.mxu0 0.0
    %303 = vmatpush.msra.mxu0 0.0
    %304 = vmatpush.msra.mxu0 0.0
    %305 = vmatpush.msra.mxu0 0.0
    %306 = vmatpush.msra.mxu0 0.0
    %307 = vmatpush.msra.mxu0 %v283
    %308 = vmatpush.msra.mxu0 %v282
    %309 = vmatmul.f32.gmra.mxu0 %v291
    %v310 = vpop.f32.mrf.mxu0
    %v311 = vadd.f32 %v286, %v310
    %312 = vdwg.mxu0
    %v313 = vlaneseq
    %v314 = vand.u32 %v313, 127
    %vm315 = vcmp.lt.s32.totalorder %v314, 0
    %v316 = vsub.s32 0, %v314
    %v317 = vsel %vm315, %v316, %v314
    %v318 = vand.u32 %v317, 65535
    %v319 = vshrl.u32 %v317, 16
    %v321 = vmul.u32 %v318, 43691
    %v322 = vmul.u32 %v318, 43690
    %v323 = vmul.u32 %v319, 43691
    %v324 = vmul.u32 %v319, 43690
    %v325 = vshll.u32 %v322, 16
    %v326 = vshrl.u32 %v322, 16
    %v327 = vshll.u32 %v323, 16
    %v328 = vshrl.u32 %v323, 16
    %vm329 = vc.u32 %v321, %v325
    %v330 = vsel %vm329, 1, 0
    %v331 = vadd.s32 %v321, %v325
    %v332 = vadd.s32 %v324, %v330
    %vm333 = vc.u32 %v331, %v327
    %v334 = vsel %vm333, 1, 0
    %v335 = vadd.s32 %v331, %v327
    %v336 = vadd.s32 %v332, %v334
    %v337 = vadd.s32 %v336, %v326
    %v338 = vadd.s32 %v337, %v328
    %v339 = vshrl.u32 %v338, 2
    %v340 = vmul.u32 %v339, 6
    %v341 = vsub.s32 %v317, %v340
    %v342 = vsub.s32 0, %v341
    %v343 = vsel %vm315, %v342, %v341
    %vm344 = vcmp.ne.s32.totalorder %v343, 0
    %vm345 = vcmp.lt.s32.totalorder %v343, 0
    %vm346 = vmand %vm345, %vm344
    %v347 = vadd.s32 %v343, 6
    %v348 = vsel %vm346, %v347, %v343
    %vm349 = vcmp.lt.s32.totalorder %v348, 2
    %v350 = vtanh.pop %v311
    %vm351 = vcmp.eq.s32.totalorder %v348, 4
    %v352 = vxor.u32 %v311, 2147483648
    %v353 = vmul.f32 %v352, 1.442695
    %v354 = vpow.pop %v353
    %v355 = vadd.f32 %v354, 1.0
    %v356 = vrcp.pop %v355
    %v357 = vmul.f32 %v355, %v356
    %v358 = vsub.f32 1.0, %v357
    %v359 = vmul.f32 %v356, %v358
    %v360 = vadd.f32 %v356, %v359
    %vm361 = vweird.f32 %v355
    %vm362 = vweird.f32 %v356
    %vm363 = vmor %vm361, %vm362
    %v364 = vsel %vm363, %v356, %v360
    %v365 = vand.u32 2147483647, %v355
    %vm366 = vcmp.eq.f32.partialorder %v365, 8.507059e+37
    %v367 = vand.u32 %v355, 2147483648
    %v368 = vor.u32 1.1754944e-38, %v367
    %v369 = vsel %vm366, %v368, %v364
    %v370 = vmul.f32 1.0, %v369
    %v371 = vsel %vm351, %v311, %v370
    %v372 = vsel %vm349, %v350, %v371
    %374 = vst.msk [vmem:[#allocation13] sm:$0xff] %vm174, %v290
    %vm375 = vcmask 261248
    %376 = vst.msk [vmem:[#allocation13] sm:$0xff] %vm375, %v275
    %378 = vrot.lane.b32.xlu0 %v372, 32
    %v379 = vpop.permute.xlu0 %378
    %vm381 = vcmask 359680
    %382 = vst.msk [vmem:[#allocation13] sm:$0xff] %vm381, %v379
    // Predicated region
    $region54: #{tpu_custom_call.1} parent=1 // pred_check
      _
    $region55: #{tpu_custom_call.1} parent=1 // pred_check_branch
      %384 = sbr.rel (0) target = $region57
    $region56: #{tpu_custom_call.1} parent=1 // pred_region
      %386 = vsyncadd [#allocation4], 0
      %s388 = sshll.u32 [#allocation13], 4
      %s389 = int_to_ptr.vmem [resolvable:$true] %s388
      %s390 = sshll.u32 %s7, 4
      %s391 = int_to_ptr.hbm [resolvable:$true] %s390
      %393 = dma.vmem_to_hbm [thread:$0]  %s389, 128, %s391, [#allocation4]
    $region57: #{tpu_custom_call.1} parent=1 // pred_fallthru
      _
    // Predicated region
    $region58: #{tpu_custom_call.1} parent=1 // pred_check
      _
    $region59: #{tpu_custom_call.1} parent=1 // pred_check_branch
      %395 = sbr.rel (0) target = $region61
    $region60: #{tpu_custom_call.1} parent=1 // pred_region
      %397 = dma.done [#allocation4], 128
    $region61: #{tpu_custom_call.1} parent=1 // pred_fallthru
      _
    %398 = vsyncpa [#allocation3], 1
    %399 = vsyncpa [#allocation6], 1
    %400 = vsyncpa [#allocation9], 1
    %401 = vsyncpa [#allocation12], 1
    %402 = vsyncpa [#allocation4], 1

</llo_original>
